<compile_context>
chip_gen: v7x
topology: tpu7x:2x2x1
jax: 0.10.0
libtpu: 0.0.40
codegen_flags: <defaults>
</compile_context>

<pallas_src>
import functools

import jax
import jax.numpy as jnp
import numpy as np
from jax.experimental import pallas as pl
from jax.experimental.pallas import tpu as pltpu

HIDDEN = 32
PAD = 128  # lane width: every layer runs lane-dense at 128 columns; lane 127 = bias lane


def _ppo_kernel(x_ref, w_ref, out_ref, *, act_dim):
    x = x_ref[...]  # (TB, 128); features in cols [0,D), col 127 == 1.0 (bias lane)

    # Three lane-dense 128x128 MXU passes. Biases ride in row 127 of each weight
    # block (x/h col 127 carries the constant 1), so no separate adds are needed.
    h = jnp.maximum(jnp.dot(x, w_ref[0], preferred_element_type=jnp.float32), 0.0)
    h = jnp.maximum(jnp.dot(h, w_ref[1], preferred_element_type=jnp.float32), 0.0)
    z = jnp.dot(h, w_ref[2], preferred_element_type=jnp.float32)
    # z: cols [0,A) actor logits, col A critic value, rest exactly 0.

    # Masked softmax over the logit columns only.
    col = jax.lax.broadcasted_iota(jnp.int32, z.shape, 1)
    logits = jnp.where(col < act_dim, z, -jnp.inf)
    m = jnp.max(logits, axis=-1, keepdims=True)
    e = jnp.exp(logits - m)                                   # masked cols -> 0
    probs = e * pl.reciprocal(jnp.sum(e, axis=-1, keepdims=True), approx=False)

    # Single lane-dense store: probs in [0,A), raw value at col A, zeros elsewhere.
    out_ref[...] = jnp.where(col == act_dim, z, probs)


def pack_params(params, input_dim, output_dim):
    """Fuse actor+critic into block-diagonal weights, fold biases into row 127,
    pad lane-dense to (3, 128, 128). Done once at init time."""
    H, P = HIDDEN, PAD
    assert 1 <= input_dim <= P - 1          # lane 127 reserved for the bias constant
    assert 1 <= output_dim <= P - 2         # value column (A) must stay below lane 127
    f32 = jnp.float32

    # Layer 1: rows [0,D) = [w1a | w1c], row 127 = [b1a | b1c], (127,127)=1 keeps bias lane.
    w1 = jnp.zeros((P, P), f32)
    w1 = w1.at[:input_dim, :H].set(params["w1a"].astype(f32))
    w1 = w1.at[:input_dim, H:2 * H].set(params["w1c"].astype(f32))
    w1 = w1.at[P - 1, :H].set(params["b1a"][0].astype(f32))
    w1 = w1.at[P - 1, H:2 * H].set(params["b1c"][0].astype(f32))
    w1 = w1.at[P - 1, P - 1].set(1.0)

    # Layer 2: block-diagonal hidden, biases in row 127, bias lane propagated.
    w2 = jnp.zeros((P, P), f32)
    w2 = w2.at[:H, :H].set(params["w2a"].astype(f32))
    w2 = w2.at[H:2 * H, H:2 * H].set(params["w2c"].astype(f32))
    w2 = w2.at[P - 1, :H].set(params["b2a"][0].astype(f32))
    w2 = w2.at[P - 1, H:2 * H].set(params["b2c"][0].astype(f32))
    w2 = w2.at[P - 1, P - 1].set(1.0)

    # Layer 3: head -> cols [0,A) logits, col A value; biases in row 127; bias lane dropped.
    w3 = jnp.zeros((P, P), f32)
    w3 = w3.at[:H, :output_dim].set(params["w3a"].astype(f32))
    w3 = w3.at[H:2 * H, output_dim:output_dim + 1].set(params["w3c"].astype(f32))
    w3 = w3.at[P - 1, :output_dim].set(params["b3a"][0].astype(f32))
    w3 = w3.at[P - 1, output_dim].set(params["b3c"][0, 0].astype(f32))

    return jnp.stack([w1, w2, w3], axis=0)  # (3, 128, 128) f32, ~192 KiB


def ppo_forward(x, w_slab, output_dim, *, block_b=512):
    """x: (B, input_dim) f32. w_slab: from pack_params. Returns (probs, value).

    Batched over a grid: (TB, 128) activation tiles stream through while the weight
    slab stays VMEM-resident (constant index_map). TB=512 already sits near the HBM
    roofline and keeps VMEM use ~1.2 MiB, comfortably under v7x's 64 MiB."""
    B, D = x.shape
    assert D <= PAD - 1 and block_b % 8 == 0

    # Pick batch tile: cap at block_b; small batches get one sublane-aligned tile.
    TB = block_b if B > block_b else max(8, ((B + 7) // 8) * 8)
    B_pad = pl.cdiv(B, TB) * TB

    # Lane-dense input slab: features in [0,D), zeros up to 126, bias constant at 127.
    x_body = jnp.pad(x.astype(jnp.float32), ((0, B_pad - B), (0, PAD - 1 - D)))
    x_pad = jnp.concatenate([x_body, jnp.ones((B_pad, 1), jnp.float32)], axis=1)

    kernel = functools.partial(_ppo_kernel, act_dim=output_dim)

    out = pl.pallas_call(
        kernel,
        grid=(B_pad // TB,),
        in_specs=[
            pl.BlockSpec((TB, PAD), lambda i: (i, 0)),          # streamed activations
            pl.BlockSpec((3, PAD, PAD), lambda i: (0, 0, 0)),   # weights: fetched once, VMEM-resident
        ],
        out_specs=pl.BlockSpec((TB, PAD), lambda i: (i, 0)),
        out_shape=jax.ShapeDtypeStruct((B_pad, PAD), jnp.float32),
        compiler_params=pltpu.CompilerParams(
            dimension_semantics=("parallel",),                   # v7x: shard tiles across 2 TCs
        ),
    )(x_pad, w_slab)

    # Padded tail rows (if B % TB != 0) hold garbage softmax rows -> sliced away here.
    probs = out[:B, :output_dim]
    value = out[:B, output_dim:output_dim + 1]
    return probs, value


def init_params(key, input_dim, output_dim):
    """Deterministic synthetic init (shapes match PPONetwork.__init__).
    Weights stored as (in_features, out_features), i.e. transposed vs PyTorch."""
    ks = jax.random.split(key, 12)

    def lin(kw, kb, fan_in, fan_out):
        bound = 1.0 / np.sqrt(fan_in)
        w = jax.random.uniform(kw, (fan_in, fan_out), jnp.float32, -bound, bound)
        b = jax.random.uniform(kb, (1, fan_out), jnp.float32, -bound, bound)
        return w, b

    p = {}
    p["w1a"], p["b1a"] = lin(ks[0], ks[1], input_dim, HIDDEN)
    p["w2a"], p["b2a"] = lin(ks[2], ks[3], HIDDEN, HIDDEN)
    p["w3a"], p["b3a"] = lin(ks[4], ks[5], HIDDEN, output_dim)
    p["w1c"], p["b1c"] = lin(ks[6], ks[7], input_dim, HIDDEN)
    p["w2c"], p["b2c"] = lin(ks[8], ks[9], HIDDEN, HIDDEN)
    p["w3c"], p["b3c"] = lin(ks[10], ks[11], HIDDEN, 1)
    return p


def _reference(x, p):
    def mlp(x, w1, b1, w2, b2, w3, b3):
        h = jnp.maximum(x @ w1 + b1, 0.0)
        h = jnp.maximum(h @ w2 + b2, 0.0)
        return h @ w3 + b3

    logits = mlp(x, p["w1a"], p["b1a"], p["w2a"], p["b2a"], p["w3a"], p["b3a"])
    probs = jax.nn.softmax(logits, axis=-1)
    value = mlp(x, p["w1c"], p["b1c"], p["w2c"], p["b2c"], p["w3c"], p["b3c"])
    return probs, value


if __name__ == "__main__":
    key = jax.random.PRNGKey(0)
    k_x, k_p, k_big = jax.random.split(key, 3)

    input_dim, output_dim = 16, 4
    params = init_params(k_p, input_dim, output_dim)
    w_slab = pack_params(params, input_dim, output_dim)  # one-time packing (fused + bias-folded)

    # Small test (single-tile grid), shapes consistent with the module.
    batch = 8
    x = jax.random.normal(k_x, (batch, input_dim), dtype=jnp.float32)
    probs, value = ppo_forward(x, w_slab, output_dim)
    jax.block_until_ready((probs, value))

    ref_probs, ref_value = _reference(x, params)
    assert probs.shape == (batch, output_dim) and value.shape == (batch, 1)
    np.testing.assert_allclose(np.asarray(probs), np.asarray(ref_probs), rtol=1e-5, atol=1e-5)
    np.testing.assert_allclose(np.asarray(value), np.asarray(ref_value), rtol=1e-5, atol=1e-5)
    np.testing.assert_allclose(np.asarray(probs).sum(axis=-1), np.ones(batch), rtol=1e-5, atol=1e-5)

    # Larger, non-divisible batch: exercises the multi-tile grid, the VMEM-resident
    # weight slab, and the tail-row slicing.
    big_batch = 1000
    x_big = jax.random.normal(k_big, (big_batch, input_dim), dtype=jnp.float32)
    probs_b, value_b = ppo_forward(x_big, w_slab, output_dim, block_b=512)
    jax.block_until_ready((probs_b, value_b))

    ref_probs_b, ref_value_b = _reference(x_big, params)
    assert probs_b.shape == (big_batch, output_dim) and value_b.shape == (big_batch, 1)
    np.testing.assert_allclose(np.asarray(probs_b), np.asarray(ref_probs_b), rtol=1e-5, atol=1e-5)
    np.testing.assert_allclose(np.asarray(value_b), np.asarray(ref_value_b), rtol=1e-5, atol=1e-5)

    print("KERNEL_OK")
</pallas_src>

<mosaic_0001>
module attributes {stable_mosaic.version = 11 : i64} {
  func.func @_ppo_kernel(%arg0: i32, %arg1: memref<8x128xf32, #tpu.memory_space<vmem>>, %arg2: memref<3x128x128xf32, #tpu.memory_space<vmem>>, %arg3: memref<8x128xf32, #tpu.memory_space<vmem>>) attributes {dimension_semantics = [#tpu.dimension_semantics<parallel>], iteration_bounds = array<i64: 1>, scalar_prefetch = 0 : i64, scratch_operands = 0 : i64, tpu.core_type = #tpu.core_type<tc>, window_params = [{transform_indices = @transform_0, window_bounds = array<i64: 8, 128>}, {pipeline_mode = #tpu.pipeline_mode<synchronous>, transform_indices = @transform_1, window_bounds = array<i64: 3, 128, 128>}, {transform_indices = @transform_2, window_bounds = array<i64: 8, 128>}]} {
    %c0 = arith.constant 0 : index
    %c0_0 = arith.constant 0 : index
    %0 = vector.load %arg1[%c0, %c0_0] : memref<8x128xf32, #tpu.memory_space<vmem>>, vector<8x128xf32>
    %c0_1 = arith.constant 0 : index
    %c0_2 = arith.constant 0 : index
    %c0_3 = arith.constant 0 : index
    %1 = vector.load %arg2[%c0_1, %c0_2, %c0_3] : memref<3x128x128xf32, #tpu.memory_space<vmem>>, vector<1x128x128xf32>
    %2 = vector.shape_cast %1 : vector<1x128x128xf32> to vector<128x128xf32>
    %cst = arith.constant dense<0.000000e+00> : vector<8x128xf32>
    %3 = tpu.matmul %0, %2, %cst {dimension_numbers = #tpu.dot_dimension_numbers<[1], [0], [0], [1], [0, 0, 1, 1], [], []>} : vector<8x128xf32>, vector<128x128xf32>, vector<8x128xf32> -> vector<8x128xf32>
    %cst_4 = arith.constant 0.000000e+00 : f32
    %4 = vector.broadcast %cst_4 : f32 to vector<8x128xf32>
    %5 = arith.maximumf %3, %4 : vector<8x128xf32>
    %c1 = arith.constant 1 : index
    %c0_5 = arith.constant 0 : index
    %c0_6 = arith.constant 0 : index
    %6 = vector.load %arg2[%c1, %c0_5, %c0_6] : memref<3x128x128xf32, #tpu.memory_space<vmem>>, vector<1x128x128xf32>
    %7 = vector.shape_cast %6 : vector<1x128x128xf32> to vector<128x128xf32>
    %cst_7 = arith.constant dense<0.000000e+00> : vector<8x128xf32>
    %8 = tpu.matmul %5, %7, %cst_7 {dimension_numbers = #tpu.dot_dimension_numbers<[1], [0], [0], [1], [0, 0, 1, 1], [], []>} : vector<8x128xf32>, vector<128x128xf32>, vector<8x128xf32> -> vector<8x128xf32>
    %cst_8 = arith.constant 0.000000e+00 : f32
    %9 = vector.broadcast %cst_8 : f32 to vector<8x128xf32>
    %10 = arith.maximumf %8, %9 : vector<8x128xf32>
    %c2 = arith.constant 2 : index
    %c0_9 = arith.constant 0 : index
    %c0_10 = arith.constant 0 : index
    %11 = vector.load %arg2[%c2, %c0_9, %c0_10] : memref<3x128x128xf32, #tpu.memory_space<vmem>>, vector<1x128x128xf32>
    %12 = vector.shape_cast %11 : vector<1x128x128xf32> to vector<128x128xf32>
    %cst_11 = arith.constant dense<0.000000e+00> : vector<8x128xf32>
    %13 = tpu.matmul %10, %12, %cst_11 {dimension_numbers = #tpu.dot_dimension_numbers<[1], [0], [0], [1], [0, 0, 1, 1], [], []>} : vector<8x128xf32>, vector<128x128xf32>, vector<8x128xf32> -> vector<8x128xf32>
    %14 = tpu.iota {dimensions = array<i32: 1>} : vector<8x128xi32>
    %c4_i32 = arith.constant 4 : i32
    %15 = vector.broadcast %c4_i32 : i32 to vector<8x128xi32>
    %16 = arith.cmpi slt, %14, %15 : vector<8x128xi32>
    %cst_12 = arith.constant 0xFF800000 : f32
    %17 = vector.broadcast %cst_12 : f32 to vector<8x128xf32>
    %18 = arith.select %16, %13, %17 : vector<8x128xi1>, vector<8x128xf32>
    %cst_13 = arith.constant dense<0xFF800000> : vector<8xf32>
    %19 = vector.multi_reduction <maximumf>, %18, %cst_13 [1] : vector<8x128xf32> to vector<8xf32>
    %20 = vector.shape_cast %19 : vector<8xf32> to vector<8x1xf32>
    %21 = vector.broadcast %20 : vector<8x1xf32> to vector<8x128xf32>
    %22 = arith.subf %18, %21 : vector<8x128xf32>
    %23 = math.exp %22 : vector<8x128xf32>
    %cst_14 = arith.constant dense<0.000000e+00> : vector<8xf32>
    %24 = vector.multi_reduction <add>, %23, %cst_14 [1] : vector<8x128xf32> to vector<8xf32>
    %25 = vector.shape_cast %24 : vector<8xf32> to vector<8x1xf32>
    %26 = tpu.reciprocal %25 : vector<8x1xf32> -> vector<8x1xf32>
    %27 = vector.broadcast %26 : vector<8x1xf32> to vector<8x128xf32>
    %28 = arith.mulf %23, %27 : vector<8x128xf32>
    %c4_i32_15 = arith.constant 4 : i32
    %29 = vector.broadcast %c4_i32_15 : i32 to vector<8x128xi32>
    %30 = arith.cmpi eq, %14, %29 : vector<8x128xi32>
    %31 = arith.select %30, %13, %28 : vector<8x128xi1>, vector<8x128xf32>
    %c0_16 = arith.constant 0 : index
    %c0_17 = arith.constant 0 : index
    %32 = vector.load %arg3[%c0_16, %c0_17] : memref<8x128xf32, #tpu.memory_space<vmem>>, vector<8x128xf32>
    tpu.vector_store %arg3[%c0_16, %c0_17], %31 {strides = array<i32>} : memref<8x128xf32, #tpu.memory_space<vmem>>, vector<8x128xf32>,
    return
  }
  func.func @transform_0(%arg0: i32) -> (i32, i32) {
    %c0_i32 = arith.constant 0 : i32
    %c0_i32_0 = arith.constant 0 : i32
    return %arg0, %c0_i32 : i32, i32
  }
  func.func @transform_1(%arg0: i32) -> (i32, i32, i32) {
    %c0_i32 = arith.constant 0 : i32
    %c0_i32_0 = arith.constant 0 : i32
    %c0_i32_1 = arith.constant 0 : i32
    %c0_i32_2 = arith.constant 0 : i32
    return %c0_i32, %c0_i32_0, %c0_i32_1 : i32, i32, i32
  }
  func.func @transform_2(%arg0: i32) -> (i32, i32) {
    %c0_i32 = arith.constant 0 : i32
    %c0_i32_0 = arith.constant 0 : i32
    return %arg0, %c0_i32 : i32, i32
  }
}

</mosaic_0001>

<llo_original>
// kernel: tpu_custom_call.1
$region0: #{tpu_custom_call.1}
  #allocation0 [shape = 'u32[]', space=smem, size = 0x4, offset = 0x4, fixed_abs, tag = 'smem constant byte address 0x4 - core index']
  #allocation1 [shape = 'u32[144,128]{1,0:T(1,128)}', space=vmem, size = 0x12000, scoped, tag = 'internal scratch']
  %s0 = inlined_call_operand.hbm [shape: f32[8,128], index: 0, kind: input, shape index: {}]
  %s1 = inlined_call_operand.hbm [shape: f32[3,128,128], index: 1, kind: input, shape index: {}]
  %s2 = inlined_call_operand.hbm [shape: f32[8,128], index: 2, kind: output, shape index: {}]
  %s3 = sld [smem:[#allocation0]]
  $region26: #{tpu_custom_call.1} parent=0
    _
  %s5 = ssub.s32 1, %s3
  %s6 = scalar_select 0, %s5, %s3
  $region1: #{tpu_custom_call.1} parent=0
    #allocation2 [shape = 'u8[4096]{0}', space=vmem, size = 0x1000, scoped, tag = 'input window, operand 0, single buffered']
    #allocation3 [shape = 's32[1]{0}', space=sflag, size = 0x4, scoped, tag = 'scoped memory for tpu_custom_call.1']
    #allocation4 [shape = 's32[1]{0}', space=sflag, size = 0x4, scoped, tag = 'scoped memory for tpu_custom_call.1']
    #allocation5 [shape = 'u8[196608]{0}', space=vmem, size = 0x30000, scoped, tag = 'input window, operand 1, single buffered']
    #allocation6 [shape = 's32[1]{0}', space=sflag, size = 0x4, scoped, tag = 'scoped memory for tpu_custom_call.1']
    #allocation7 [shape = 'u8[4096]{0}', space=vmem, size = 0x1000, scoped, tag = 'output window, operand 0, single buffered']
    %7 = vsyncpa [#allocation3], 0
    %8 = vsyncpa [#allocation6], 0
    %9 = vsyncpa [#allocation4], 0
    // Predicated region
    $region2: #{tpu_custom_call.1} parent=1 // pred_check
      _
    $region3: #{tpu_custom_call.1} parent=1 // pred_check_branch
      %11 = sbr.rel (0) target = $region5
    $region4: #{tpu_custom_call.1} parent=1 // pred_region
      %s13 = ssub.s32 128, 128
      %14 = vsyncadd [#allocation3], %s13
      %s16 = sshll.u32 [#allocation2], 4
      %s17 = int_to_ptr.vmem [resolvable:$true] %s16
      %19 = dma.hbm_to_vmem [thread:$0]  %s0, 128, %s17, [#allocation3]
    $region5: #{tpu_custom_call.1} parent=1 // pred_fallthru
      _
    // Predicated region
    $region6: #{tpu_custom_call.1} parent=1 // pred_check
      _
    $region7: #{tpu_custom_call.1} parent=1 // pred_check_branch
      %21 = sbr.rel (0) target = $region9
    $region8: #{tpu_custom_call.1} parent=1 // pred_region
      %s23 = ssub.s32 6144, 6144
      %24 = vsyncadd [#allocation6], %s23
      %s25 = sshll.u32 [#allocation5], 4
      %s26 = int_to_ptr.vmem [resolvable:$true] %s25
      %31 = dma.hbm_to_vmem [thread:$0]  %s1, 6144, %s26, [#allocation6], 128, 128, 8
    $region9: #{tpu_custom_call.1} parent=1 // pred_fallthru
      _
    // Predicated region
    $region10: #{tpu_custom_call.1} parent=1 // pred_check
      _
    $region11: #{tpu_custom_call.1} parent=1 // pred_check_branch
      %33 = sbr.rel (0) target = $region13
    $region12: #{tpu_custom_call.1} parent=1 // pred_region
      %34 = dma.done [#allocation3], 128
    $region13: #{tpu_custom_call.1} parent=1 // pred_fallthru
      _
    // Predicated region
    $region14: #{tpu_custom_call.1} parent=1 // pred_check
      _
    $region15: #{tpu_custom_call.1} parent=1 // pred_check_branch
      %36 = sbr.rel (0) target = $region17
    $region16: #{tpu_custom_call.1} parent=1 // pred_region
      %37 = dma.done [#allocation6], 6144
    $region17: #{tpu_custom_call.1} parent=1 // pred_fallthru
      _
    %v38 = vld [vmem:[#allocation2] sm:$0xff]
    %v39 = vld [vmem:[#allocation5] sm:$0xff]
    %v40 = vld [vmem:[#allocation5 + $0x8] sm:$0xff]
    %v41 = vld [vmem:[#allocation5 + $0x10] sm:$0xff]
    %v42 = vld [vmem:[#allocation5 + $0x18] sm:$0xff]
    %v43 = vld [vmem:[#allocation5 + $0x20] sm:$0xff]
    %v44 = vld [vmem:[#allocation5 + $0x28] sm:$0xff]
    %v45 = vld [vmem:[#allocation5 + $0x30] sm:$0xff]
    %v46 = vld [vmem:[#allocation5 + $0x38] sm:$0xff]
    %v47 = vld [vmem:[#allocation5 + $0x40] sm:$0xff]
    %v48 = vld [vmem:[#allocation5 + $0x48] sm:$0xff]
    %v49 = vld [vmem:[#allocation5 + $0x50] sm:$0xff]
    %v50 = vld [vmem:[#allocation5 + $0x58] sm:$0xff]
    %v51 = vld [vmem:[#allocation5 + $0x60] sm:$0xff]
    %v52 = vld [vmem:[#allocation5 + $0x68] sm:$0xff]
    %v53 = vld [vmem:[#allocation5 + $0x70] sm:$0xff]
    %v54 = vld [vmem:[#allocation5 + $0x78] sm:$0xff]
    %55 = vmatprep.subr.mxu0 0.0
    %56 = vmatpush1.msra.mxu0 %v39
    %57 = vmatprep.subr.mxu0 0.0
    %58 = vmatpush1.msra.mxu0 %v40
    %59 = vmatprep.subr.mxu0 0.0
    %60 = vmatpush1.msra.mxu0 %v41
    %61 = vmatprep.subr.mxu0 0.0
    %62 = vmatpush1.msra.mxu0 %v42
    %63 = vmatprep.subr.mxu0 0.0
    %64 = vmatpush1.msra.mxu0 %v43
    %65 = vmatprep.subr.mxu0 0.0
    %66 = vmatpush1.msra.mxu0 %v44
    %67 = vmatprep.subr.mxu0 0.0
    %68 = vmatpush1.msra.mxu0 %v45
    %69 = vmatprep.subr.mxu0 0.0
    %70 = vmatpush1.msra.mxu0 %v46
    %71 = vmatprep.subr.mxu0 0.0
    %72 = vmatpush1.msra.mxu0 %v47
    %73 = vmatprep.subr.mxu0 0.0
    %74 = vmatpush1.msra.mxu0 %v48
    %75 = vmatprep.subr.mxu0 0.0
    %76 = vmatpush1.msra.mxu0 %v49
    %77 = vmatprep.subr.mxu0 0.0
    %78 = vmatpush1.msra.mxu0 %v50
    %79 = vmatprep.subr.mxu0 0.0
    %80 = vmatpush1.msra.mxu0 %v51
    %81 = vmatprep.subr.mxu0 0.0
    %82 = vmatpush1.msra.mxu0 %v52
    %83 = vmatprep.subr.mxu0 0.0
    %84 = vmatpush1.msra.mxu0 %v53
    %85 = vmatprep.subr.mxu0 0.0
    %86 = vmatpush1.msra.mxu0 %v54
    %87 = vmatprep.subr.mxu0 0.0
    %88 = vmatpush1.msra.mxu0 0.0
    %89 = vmatprep.subr.mxu0 0.0
    %90 = vmatpush1.msra.mxu0 0.0
    %91 = vmatprep.subr.mxu0 0.0
    %92 = vmatpush1.msra.mxu0 0.0
    %93 = vmatprep.subr.mxu0 0.0
    %94 = vmatpush1.msra.mxu0 0.0
    %95 = vmatprep.subr.mxu0 0.0
    %96 = vmatpush1.msra.mxu0 0.0
    %97 = vmatprep.subr.mxu0 0.0
    %98 = vmatpush1.msra.mxu0 0.0
    %99 = vmatprep.subr.mxu0 0.0
    %100 = vmatpush1.msra.mxu0 0.0
    %101 = vmatprep.subr.mxu0 0.0
    %102 = vmatpush1.msra.mxu0 0.0
    %103 = vmatprep.subr.mxu0 0.0
    %104 = vmatpush1.msra.mxu0 0.0
    %105 = vmatprep.subr.mxu0 0.0
    %106 = vmatpush1.msra.mxu0 0.0
    %107 = vmatprep.subr.mxu0 0.0
    %108 = vmatpush1.msra.mxu0 0.0
    %109 = vmatprep.subr.mxu0 0.0
    %110 = vmatpush1.msra.mxu0 0.0
    %111 = vmatprep.subr.mxu0 0.0
    %112 = vmatpush1.msra.mxu0 0.0
    %113 = vmatprep.subr.mxu0 0.0
    %114 = vmatpush1.msra.mxu0 0.0
    %115 = vmatprep.subr.mxu0 0.0
    %116 = vmatpush1.msra.mxu0 0.0
    %117 = vmatprep.subr.mxu0 0.0
    %118 = vmatpush1.msra.mxu0 0.0
    %119 = vmatprep.mubr.f32.mxu0 0.0
    %120 = vmatmul.mubr.f32.gmra.mrb[0].mxu0 %v38
    %v121 = vpop.f32.mrb[0].mxu0
    %v122 = vadd.f32 0.0, %v121
    %v123 = vpop.f32.mrb[0].mxu0
    %124 = vdwg.mxu0
    %v125 = vmax.f32 %v122, 0.0
    %s126 = scalar_lea.vmem [#allocation5], 128
    %v127 = vld [vmem:[%s126] sm:$0xff]
    %v128 = vld [vmem:[%s126 + $0x8] sm:$0xff]
    %v129 = vld [vmem:[%s126 + $0x10] sm:$0xff]
    %v130 = vld [vmem:[%s126 + $0x18] sm:$0xff]
    %v131 = vld [vmem:[%s126 + $0x20] sm:$0xff]
    %v132 = vld [vmem:[%s126 + $0x28] sm:$0xff]
    %v133 = vld [vmem:[%s126 + $0x30] sm:$0xff]
    %v134 = vld [vmem:[%s126 + $0x38] sm:$0xff]
    %v135 = vld [vmem:[%s126 + $0x40] sm:$0xff]
    %v136 = vld [vmem:[%s126 + $0x48] sm:$0xff]
    %v137 = vld [vmem:[%s126 + $0x50] sm:$0xff]
    %v138 = vld [vmem:[%s126 + $0x58] sm:$0xff]
    %v139 = vld [vmem:[%s126 + $0x60] sm:$0xff]
    %v140 = vld [vmem:[%s126 + $0x68] sm:$0xff]
    %v141 = vld [vmem:[%s126 + $0x70] sm:$0xff]
    %v142 = vld [vmem:[%s126 + $0x78] sm:$0xff]
    %143 = vmatprep.subr.mxu0 0.0
    %144 = vmatpush1.msra.mxu0 %v127
    %145 = vmatprep.subr.mxu0 0.0
    %146 = vmatpush1.msra.mxu0 %v128
    %147 = vmatprep.subr.mxu0 0.0
    %148 = vmatpush1.msra.mxu0 %v129
    %149 = vmatprep.subr.mxu0 0.0
    %150 = vmatpush1.msra.mxu0 %v130
    %151 = vmatprep.subr.mxu0 0.0
    %152 = vmatpush1.msra.mxu0 %v131
    %153 = vmatprep.subr.mxu0 0.0
    %154 = vmatpush1.msra.mxu0 %v132
    %155 = vmatprep.subr.mxu0 0.0
    %156 = vmatpush1.msra.mxu0 %v133
    %157 = vmatprep.subr.mxu0 0.0
    %158 = vmatpush1.msra.mxu0 %v134
    %159 = vmatprep.subr.mxu0 0.0
    %160 = vmatpush1.msra.mxu0 %v135
    %161 = vmatprep.subr.mxu0 0.0
    %162 = vmatpush1.msra.mxu0 %v136
    %163 = vmatprep.subr.mxu0 0.0
    %164 = vmatpush1.msra.mxu0 %v137
    %165 = vmatprep.subr.mxu0 0.0
    %166 = vmatpush1.msra.mxu0 %v138
    %167 = vmatprep.subr.mxu0 0.0
    %168 = vmatpush1.msra.mxu0 %v139
    %169 = vmatprep.subr.mxu0 0.0
    %170 = vmatpush1.msra.mxu0 %v140
    %171 = vmatprep.subr.mxu0 0.0
    %172 = vmatpush1.msra.mxu0 %v141
    %173 = vmatprep.subr.mxu0 0.0
    %174 = vmatpush1.msra.mxu0 %v142
    %175 = vmatprep.subr.mxu0 0.0
    %176 = vmatpush1.msra.mxu0 0.0
    %177 = vmatprep.subr.mxu0 0.0
    %178 = vmatpush1.msra.mxu0 0.0
    %179 = vmatprep.subr.mxu0 0.0
    %180 = vmatpush1.msra.mxu0 0.0
    %181 = vmatprep.subr.mxu0 0.0
    %182 = vmatpush1.msra.mxu0 0.0
    %183 = vmatprep.subr.mxu0 0.0
    %184 = vmatpush1.msra.mxu0 0.0
    %185 = vmatprep.subr.mxu0 0.0
    %186 = vmatpush1.msra.mxu0 0.0
    %187 = vmatprep.subr.mxu0 0.0
    %188 = vmatpush1.msra.mxu0 0.0
    %189 = vmatprep.subr.mxu0 0.0
    %190 = vmatpush1.msra.mxu0 0.0
    %191 = vmatprep.subr.mxu0 0.0
    %192 = vmatpush1.msra.mxu0 0.0
    %193 = vmatprep.subr.mxu0 0.0
    %194 = vmatpush1.msra.mxu0 0.0
    %195 = vmatprep.subr.mxu0 0.0
    %196 = vmatpush1.msra.mxu0 0.0
    %197 = vmatprep.subr.mxu0 0.0
    %198 = vmatpush1.msra.mxu0 0.0
    %199 = vmatprep.subr.mxu0 0.0
    %200 = vmatpush1.msra.mxu0 0.0
    %201 = vmatprep.subr.mxu0 0.0
    %202 = vmatpush1.msra.mxu0 0.0
    %203 = vmatprep.subr.mxu0 0.0
    %204 = vmatpush1.msra.mxu0 0.0
    %205 = vmatprep.subr.mxu0 0.0
    %206 = vmatpush1.msra.mxu0 0.0
    %207 = vmatprep.mubr.f32.mxu0 0.0
    %208 = vmatmul.mubr.f32.gmra.mrb[0].mxu0 %v125
    %v209 = vpop.f32.mrb[0].mxu0
    %v210 = vadd.f32 0.0, %v209
    %v211 = vpop.f32.mrb[0].mxu0
    %212 = vdwg.mxu0
    %v213 = vmax.f32 %v210, 0.0
    %s214 = scalar_lea.vmem [#allocation5], 256
    %v215 = vld [vmem:[%s214] sm:$0xff]
    %v216 = vld [vmem:[%s214 + $0x8] sm:$0xff]
    %v217 = vld [vmem:[%s214 + $0x10] sm:$0xff]
    %v218 = vld [vmem:[%s214 + $0x18] sm:$0xff]
    %v219 = vld [vmem:[%s214 + $0x20] sm:$0xff]
    %v220 = vld [vmem:[%s214 + $0x28] sm:$0xff]
    %v221 = vld [vmem:[%s214 + $0x30] sm:$0xff]
    %v222 = vld [vmem:[%s214 + $0x38] sm:$0xff]
    %v223 = vld [vmem:[%s214 + $0x40] sm:$0xff]
    %v224 = vld [vmem:[%s214 + $0x48] sm:$0xff]
    %v225 = vld [vmem:[%s214 + $0x50] sm:$0xff]
    %v226 = vld [vmem:[%s214 + $0x58] sm:$0xff]
    %v227 = vld [vmem:[%s214 + $0x60] sm:$0xff]
    %v228 = vld [vmem:[%s214 + $0x68] sm:$0xff]
    %v229 = vld [vmem:[%s214 + $0x70] sm:$0xff]
    %v230 = vld [vmem:[%s214 + $0x78] sm:$0xff]
    %231 = vmatprep.subr.mxu0 0.0
    %232 = vmatpush1.msra.mxu0 %v215
    %233 = vmatprep.subr.mxu0 0.0
    %234 = vmatpush1.msra.mxu0 %v216
    %235 = vmatprep.subr.mxu0 0.0
    %236 = vmatpush1.msra.mxu0 %v217
    %237 = vmatprep.subr.mxu0 0.0
    %238 = vmatpush1.msra.mxu0 %v218
    %239 = vmatprep.subr.mxu0 0.0
    %240 = vmatpush1.msra.mxu0 %v219
    %241 = vmatprep.subr.mxu0 0.0
    %242 = vmatpush1.msra.mxu0 %v220
    %243 = vmatprep.subr.mxu0 0.0
    %244 = vmatpush1.msra.mxu0 %v221
    %245 = vmatprep.subr.mxu0 0.0
    %246 = vmatpush1.msra.mxu0 %v222
    %247 = vmatprep.subr.mxu0 0.0
    %248 = vmatpush1.msra.mxu0 %v223
    %249 = vmatprep.subr.mxu0 0.0
    %250 = vmatpush1.msra.mxu0 %v224
    %251 = vmatprep.subr.mxu0 0.0
    %252 = vmatpush1.msra.mxu0 %v225
    %253 = vmatprep.subr.mxu0 0.0
    %254 = vmatpush1.msra.mxu0 %v226
    %255 = vmatprep.subr.mxu0 0.0
    %256 = vmatpush1.msra.mxu0 %v227
    %257 = vmatprep.subr.mxu0 0.0
    %258 = vmatpush1.msra.mxu0 %v228
    %259 = vmatprep.subr.mxu0 0.0
    %260 = vmatpush1.msra.mxu0 %v229
    %261 = vmatprep.subr.mxu0 0.0
    %262 = vmatpush1.msra.mxu0 %v230
    %263 = vmatprep.subr.mxu0 0.0
    %264 = vmatpush1.msra.mxu0 0.0
    %265 = vmatprep.subr.mxu0 0.0
    %266 = vmatpush1.msra.mxu0 0.0
    %267 = vmatprep.subr.mxu0 0.0
    %268 = vmatpush1.msra.mxu0 0.0
    %269 = vmatprep.subr.mxu0 0.0
    %270 = vmatpush1.msra.mxu0 0.0
    %271 = vmatprep.subr.mxu0 0.0
    %272 = vmatpush1.msra.mxu0 0.0
    %273 = vmatprep.subr.mxu0 0.0
    %274 = vmatpush1.msra.mxu0 0.0
    %275 = vmatprep.subr.mxu0 0.0
    %276 = vmatpush1.msra.mxu0 0.0
    %277 = vmatprep.subr.mxu0 0.0
    %278 = vmatpush1.msra.mxu0 0.0
    %279 = vmatprep.subr.mxu0 0.0
    %280 = vmatpush1.msra.mxu0 0.0
    %281 = vmatprep.subr.mxu0 0.0
    %282 = vmatpush1.msra.mxu0 0.0
    %283 = vmatprep.subr.mxu0 0.0
    %284 = vmatpush1.msra.mxu0 0.0
    %285 = vmatprep.subr.mxu0 0.0
    %286 = vmatpush1.msra.mxu0 0.0
    %287 = vmatprep.subr.mxu0 0.0
    %288 = vmatpush1.msra.mxu0 0.0
    %289 = vmatprep.subr.mxu0 0.0
    %290 = vmatpush1.msra.mxu0 0.0
    %291 = vmatprep.subr.mxu0 0.0
    %292 = vmatpush1.msra.mxu0 0.0
    %293 = vmatprep.subr.mxu0 0.0
    %294 = vmatpush1.msra.mxu0 0.0
    %295 = vmatprep.mubr.f32.mxu0 0.0
    %296 = vmatmul.mubr.f32.gmra.mrb[0].mxu0 %v213
    %v297 = vpop.f32.mrb[0].mxu0
    %v298 = vadd.f32 0.0, %v297
    %v299 = vpop.f32.mrb[0].mxu0
    %300 = vdwg.mxu0
    %v301 = vlaneseq
    %v302 = vand.u32 %v301, 127
    %vm303 = vcmp.lt.s32.totalorder %v302, 4
    %v304 = vsel %vm303, %v298, -inf
    %305 = vmax.xlane.f32.xlu0 %v304
    %v306 = vpop.xlane.xlu0 %305
    %v307 = vsub.f32 %v304, %v306
    %v308 = vmul.f32 %v307, 1.442695
    %v309 = vpow.pop %v308
    %310 = vadd.xlane.f32.xlu0 %v309
    %v311 = vpop.xlane.xlu0 %310
    %v312 = vrcp.pop %v311
    %v313 = vmul.f32 %v309, %v312
    %vm314 = vcmp.eq.s32.totalorder %v302, 4
    %v315 = vsel %vm314, %v298, %v313
    %316 = vst [vmem:[#allocation7] sm:$0xff] %v315
    // Predicated region
    $region18: #{tpu_custom_call.1} parent=1 // pred_check
      _
    $region19: #{tpu_custom_call.1} parent=1 // pred_check_branch
      %318 = sbr.rel (0) target = $region21
    $region20: #{tpu_custom_call.1} parent=1 // pred_region
      %s320 = ssub.s32 128, 128
      %321 = vsyncadd [#allocation4], %s320
      %s323 = sshll.u32 [#allocation7], 4
      %s324 = int_to_ptr.vmem [resolvable:$true] %s323
      %326 = dma.vmem_to_hbm [thread:$0]  %s324, 128, %s2, [#allocation4]
    $region21: #{tpu_custom_call.1} parent=1 // pred_fallthru
      _
    // Predicated region
    $region22: #{tpu_custom_call.1} parent=1 // pred_check
      _
    $region23: #{tpu_custom_call.1} parent=1 // pred_check_branch
      %328 = sbr.rel (0) target = $region25
    $region24: #{tpu_custom_call.1} parent=1 // pred_region
      %329 = dma.done [#allocation4], 128
    $region25: #{tpu_custom_call.1} parent=1 // pred_fallthru
      _
    %330 = vsyncpa [#allocation3], 1
    %331 = vsyncpa [#allocation6], 1
    %332 = vsyncpa [#allocation4], 1

</llo_original>
